<compile_context>
chip_gen: v6e
topology: v6e:2x2x1
jax: 0.10.0
libtpu: 0.0.40
codegen_flags: <defaults>
</compile_context>

<pallas_src>
import functools

import jax
import jax.numpy as jnp
from jax.experimental import pallas as pl
from jax.experimental.pallas import tpu as pltpu


def _serial_selection_kernel(f_ref, w_ref, o_ref):
    # f_ref: (TB, N*M) lane-dense feature tile
    # w_ref: (N*M, 2N) resident selection matrix ( +v block-diag | -v block-diag )
    # o_ref: (TB, 2N)  logits tile — single full-tile store
    o_ref[...] = jnp.dot(
        f_ref[...],
        w_ref[...],
        preferred_element_type=jnp.float32,
        precision=jax.lax.Precision.HIGHEST,  # free: kernel is HBM-bound
    ).astype(o_ref.dtype)


def _vmem_capacity_bytes():
    try:
        return int(pltpu.get_tpu_info().vmem_capacity_bytes)
    except Exception:
        return 64 << 20  # conservative (v7x per-TC figure)


def _choose_batch_tile(batch, feature_dim, itemsize, out_cols, out_itemsize,
                       max_block_rows=None):
    """Pick the batch-tile size tb and a matching vmem limit.

    Footprint per grid step (double-buffered by BlockSpec pipelining):
        2 * tb * feature_dim * itemsize           (input tile)
      + 2 * tb * lane_pad(out_cols) * out_itemsize (output tile; 2N lanes pad to 128)
      + feature_dim * out_cols * itemsize          (resident W, tiny)
    """
    # Sublane packing: 8 rows for 32-bit, 16 for 16-bit, 32 for 8-bit dtypes.
    sublane = max(8, 8 * (4 // max(1, itemsize)))

    vmem_cap = _vmem_capacity_bytes()
    budget = int(vmem_cap * 0.55)  # leave headroom for internal scratch

    out_lanes = max(128, ((out_cols + 127) // 128) * 128)  # lane padding
    row_bytes = 2 * feature_dim * itemsize + 2 * out_lanes * out_itemsize
    w_bytes = feature_dim * out_cols * itemsize

    tb_max = max(sublane, (budget - w_bytes) // max(1, row_bytes))
    tb_max = min(tb_max, 32768)
    if max_block_rows is not None:
        tb_max = min(tb_max, max(sublane, int(max_block_rows)))

    if tb_max >= batch:
        tb = batch  # single full-batch block (no (8,128) constraint then)
    else:
        num_blocks = pl.cdiv(batch, tb_max)
        # Megacore balance (v7x): even number of comparably sized blocks
        # instead of N full blocks + a tiny ragged tail.
        if num_blocks <= 8 and num_blocks % 2 == 1:
            num_blocks += 1
        tb = -(-batch // num_blocks)                      # ceil
        tb = ((tb + sublane - 1) // sublane) * sublane    # sublane rounding
        tb = min(tb, tb_max)

    used = 2 * tb * feature_dim * itemsize + 2 * tb * out_lanes * out_itemsize + w_bytes
    vmem_limit = min(int(vmem_cap * 0.75), used + (8 << 20))
    return tb, vmem_limit


@functools.partial(jax.jit, static_argnames=("asset_num", "hidden_dim", "max_block_rows"))
def simple_serial_selection(features, selection_vector, *, asset_num, hidden_dim,
                            max_block_rows=None):
    """features: any shape reshapeable to (-1, asset_num * hidden_dim).
    selection_vector: shape (1, hidden_dim) (nn.Parameter(Tensor(M).unsqueeze(0)))."""
    feature_dim = asset_num * hidden_dim
    feats = features.reshape(-1, feature_dim)  # flat, lane-dense layout
    batch = feats.shape[0]
    dtype = feats.dtype
    itemsize = jnp.dtype(dtype).itemsize
    out_cols = 2 * asset_num

    # Fold reduce + negate + concat into one matmul operand:
    #   W[n*M + m, n] = v[m],  W[n*M + m, N + n] = -v[m]
    # NOTE: for bf16/fp8 features W is rounded to the feature dtype before the
    # MXU — a small deviation from PyTorch's f32-parameter multiply+reduce.
    v = selection_vector.reshape(hidden_dim).astype(jnp.float32)
    w_pos = jnp.kron(jnp.eye(asset_num, dtype=jnp.float32), v[:, None])  # (N*M, N)
    w = jnp.concatenate([w_pos, -w_pos], axis=1).astype(dtype)           # (N*M, 2N)

    tb, vmem_limit = _choose_batch_tile(
        batch, feature_dim, itemsize, out_cols, itemsize, max_block_rows)
    grid = (pl.cdiv(batch, tb),)

    cost = pl.CostEstimate(
        flops=2 * batch * feature_dim * out_cols,
        transcendentals=0,
        bytes_accessed=(batch * feature_dim
                        + feature_dim * out_cols
                        + batch * out_cols) * itemsize,
    )

    return pl.pallas_call(
        _serial_selection_kernel,
        out_shape=jax.ShapeDtypeStruct((batch, out_cols), dtype),
        grid=grid,
        in_specs=[
            # Batch-tiled, lane-dense feature blocks (pipelined over the grid).
            pl.BlockSpec((tb, feature_dim), lambda i: (i, 0)),
            # Tiny selection matrix: constant index_map -> loaded once, resident.
            pl.BlockSpec((feature_dim, out_cols), lambda i: (0, 0)),
        ],
        out_specs=pl.BlockSpec((tb, out_cols), lambda i: (i, 0)),
        compiler_params=pltpu.CompilerParams(
            dimension_semantics=("parallel",),   # megacore sharding on v7x
            vmem_limit_bytes=int(vmem_limit),    # derived from tile arithmetic
        ),
        cost_estimate=cost,
    )(feats, w)


def _reference(x, selection_vector, asset_num, hidden_dim):
    # Exact f32 VPU reference.
    feats = x.reshape(-1, asset_num, hidden_dim).astype(jnp.float32)
    v = selection_vector.reshape(hidden_dim).astype(jnp.float32)
    fwd = jnp.sum(feats * v[None, None, :], axis=-1)
    return jnp.concatenate([fwd, -fwd], axis=1)


if __name__ == "__main__":
    # Shapes consistent with the module:
    #   asset_num N = 8, hidden_dim M = 32, feature_dim = N * M = 256, batch = 2
    asset_num, hidden_dim = 8, 32
    feature_dim = asset_num * hidden_dim

    key = jax.random.PRNGKey(0)
    k_feat, k_sel, k_big = jax.random.split(key, 3)

    selection_vector = jax.random.normal(k_sel, (1, hidden_dim), dtype=jnp.float32)

    # --- small test (single full-batch block) ---
    batch = 2
    x = jax.random.normal(k_feat, (batch, feature_dim), dtype=jnp.float32)
    out = simple_serial_selection(
        x, selection_vector, asset_num=asset_num, hidden_dim=hidden_dim
    )
    out = jax.block_until_ready(out)
    ref = _reference(x, selection_vector, asset_num, hidden_dim)
    assert out.shape == (batch, 2 * asset_num), out.shape
    assert jnp.allclose(out, ref, atol=1e-4, rtol=1e-4), "mismatch vs reference (small)"

    # --- larger test exercising the batch grid, ragged tail and rebalancing ---
    big_batch = 2056
    xb = jax.random.normal(k_big, (big_batch, feature_dim), dtype=jnp.float32)
    outb = simple_serial_selection(
        xb, selection_vector, asset_num=asset_num, hidden_dim=hidden_dim,
        max_block_rows=512,   # force multi-block path for testing
    )
    outb = jax.block_until_ready(outb)
    refb = _reference(xb, selection_vector, asset_num, hidden_dim)
    assert outb.shape == (big_batch, 2 * asset_num), outb.shape
    assert jnp.allclose(outb, refb, atol=1e-4, rtol=1e-4), "mismatch vs reference (grid)"

    # --- same large batch with auto (VMEM-derived) tiling: single big block ---
    outc = simple_serial_selection(
        xb, selection_vector, asset_num=asset_num, hidden_dim=hidden_dim
    )
    outc = jax.block_until_ready(outc)
    assert jnp.allclose(outc, refb, atol=1e-4, rtol=1e-4), "mismatch vs reference (auto)"

    print("KERNEL_OK")
</pallas_src>

<mosaic_0001>
module attributes {stable_mosaic.version = 11 : i64} {
  func.func @_serial_selection_kernel(%arg0: i32, %arg1: memref<2x256xf32, #tpu.memory_space<vmem>>, %arg2: memref<256x16xf32, #tpu.memory_space<vmem>>, %arg3: memref<2x16xf32, #tpu.memory_space<vmem>>) attributes {dimension_semantics = [#tpu.dimension_semantics<parallel>], iteration_bounds = array<i64: 1>, scalar_prefetch = 0 : i64, scratch_operands = 0 : i64, tpu.core_type = #tpu.core_type<tc>, window_params = [{transform_indices = @transform_0, window_bounds = array<i64: 2, 256>}, {pipeline_mode = #tpu.pipeline_mode<synchronous>, transform_indices = @transform_1, window_bounds = array<i64: 256, 16>}, {transform_indices = @transform_2, window_bounds = array<i64: 2, 16>}]} {
    %c0 = arith.constant 0 : index
    %c0_0 = arith.constant 0 : index
    %0 = vector.load %arg1[%c0, %c0_0] : memref<2x256xf32, #tpu.memory_space<vmem>>, vector<2x256xf32>
    %c0_1 = arith.constant 0 : index
    %c0_2 = arith.constant 0 : index
    %1 = vector.load %arg2[%c0_1, %c0_2] : memref<256x16xf32, #tpu.memory_space<vmem>>, vector<256x16xf32>
    %cst = arith.constant dense<0.000000e+00> : vector<2x16xf32>
    %2 = tpu.matmul %0, %1, %cst {dimension_numbers = #tpu.dot_dimension_numbers<[1], [0], [0], [1], [0, 0, 1, 1], [], []>, precision = #tpu.contract_precision<fp32>} : vector<2x256xf32>, vector<256x16xf32>, vector<2x16xf32> -> vector<2x16xf32>
    %c0_3 = arith.constant 0 : index
    %c0_4 = arith.constant 0 : index
    %3 = vector.load %arg3[%c0_3, %c0_4] : memref<2x16xf32, #tpu.memory_space<vmem>>, vector<2x16xf32>
    tpu.vector_store %arg3[%c0_3, %c0_4], %2 {strides = array<i32>} : memref<2x16xf32, #tpu.memory_space<vmem>>, vector<2x16xf32>,
    return
  }
  func.func @transform_0(%arg0: i32) -> (i32, i32) {
    %c0_i32 = arith.constant 0 : i32
    %c0_i32_0 = arith.constant 0 : i32
    return %arg0, %c0_i32 : i32, i32
  }
  func.func @transform_1(%arg0: i32) -> (i32, i32) {
    %c0_i32 = arith.constant 0 : i32
    %c0_i32_0 = arith.constant 0 : i32
    %c0_i32_1 = arith.constant 0 : i32
    return %c0_i32, %c0_i32_0 : i32, i32
  }
  func.func @transform_2(%arg0: i32) -> (i32, i32) {
    %c0_i32 = arith.constant 0 : i32
    %c0_i32_0 = arith.constant 0 : i32
    return %arg0, %c0_i32 : i32, i32
  }
}

</mosaic_0001>

<llo_original>
// kernel: simple_serial_selection.1
$region0: #{simple_serial_selection.1}
  #allocation0 [shape = 'u32[]', space=smem, size = 0x4, offset = 0x4, fixed_abs, tag = 'smem constant byte address 0x4 - core index']
  #allocation1 [shape = 'u32[144,128]{1,0:T(1,128)}', space=vmem, size = 0x12000, scoped, tag = 'internal scratch']
  %s0 = inlined_call_operand.vmem [shape: f32[2,256], index: 0, kind: input, shape index: {}]
  %s1 = inlined_call_operand.vmem [shape: f32[256,16], index: 1, kind: input, shape index: {}]
  %s2 = inlined_call_operand.hbm [shape: f32[2,16], index: 2, kind: output, shape index: {}]
  %s3 = sld [smem:[#allocation0]]
  $region18: #{simple_serial_selection.1} parent=0
    _
  %s5 = ssub.s32 1, %s3
  %s6 = scalar_select 0, %s5, %s3
  $region1: #{simple_serial_selection.1} parent=0
    #allocation2 [shape = 'u8[1024]{0}', space=vmem, size = 0x400, scoped, tag = 'output window, operand 0, single buffered']
    #allocation3 [shape = 's32[1]{0}', space=sflag, size = 0x4, scoped, tag = 'scoped memory for simple_serial_selection.1']
    %7 = vsyncpa [#allocation3], 0
    // Predicated region
    $region2: #{simple_serial_selection.1} parent=1 // pred_check
      _
    $region3: #{simple_serial_selection.1} parent=1 // pred_check_branch
      %9 = sbr.rel (0) target = $region5
    $region4: #{simple_serial_selection.1} parent=1 // pred_region
      _
    $region5: #{simple_serial_selection.1} parent=1 // pred_fallthru
      _
    // Predicated region
    $region6: #{simple_serial_selection.1} parent=1 // pred_check
      _
    $region7: #{simple_serial_selection.1} parent=1 // pred_check_branch
      %11 = sbr.rel (0) target = $region9
    $region8: #{simple_serial_selection.1} parent=1 // pred_region
      _
    $region9: #{simple_serial_selection.1} parent=1 // pred_fallthru
      _
    %v12 = vld [vmem:[%s0] sm:$0xf]
    %v13 = vld [vmem:[%s1] sm:$0xff]
    %v14 = vld [vmem:[%s1 + $0x8] sm:$0xff]
    %v15 = vld [vmem:[%s1 + $0x10] sm:$0xff]
    %v16 = vld [vmem:[%s1 + $0x18] sm:$0xff]
    %v17 = vld [vmem:[%s1 + $0x20] sm:$0xff]
    %v18 = vld [vmem:[%s1 + $0x28] sm:$0xff]
    %v19 = vld [vmem:[%s1 + $0x30] sm:$0xff]
    %v20 = vld [vmem:[%s1 + $0x38] sm:$0xff]
    %v21 = vld [vmem:[%s1 + $0x40] sm:$0xff]
    %v22 = vld [vmem:[%s1 + $0x48] sm:$0xff]
    %v23 = vld [vmem:[%s1 + $0x50] sm:$0xff]
    %v24 = vld [vmem:[%s1 + $0x58] sm:$0xff]
    %v25 = vld [vmem:[%s1 + $0x60] sm:$0xff]
    %v26 = vld [vmem:[%s1 + $0x68] sm:$0xff]
    %v27 = vld [vmem:[%s1 + $0x70] sm:$0xff]
    %v28 = vld [vmem:[%s1 + $0x78] sm:$0xff]
    %v29 = vld [vmem:[%s1 + $0x80] sm:$0xff]
    %v30 = vld [vmem:[%s1 + $0x88] sm:$0xff]
    %v31 = vld [vmem:[%s1 + $0x90] sm:$0xff]
    %v32 = vld [vmem:[%s1 + $0x98] sm:$0xff]
    %v33 = vld [vmem:[%s1 + $0xa0] sm:$0xff]
    %v34 = vld [vmem:[%s1 + $0xa8] sm:$0xff]
    %v35 = vld [vmem:[%s1 + $0xb0] sm:$0xff]
    %v36 = vld [vmem:[%s1 + $0xb8] sm:$0xff]
    %v37 = vld [vmem:[%s1 + $0xc0] sm:$0xff]
    %v38 = vld [vmem:[%s1 + $0xc8] sm:$0xff]
    %v39 = vld [vmem:[%s1 + $0xd0] sm:$0xff]
    %v40 = vld [vmem:[%s1 + $0xd8] sm:$0xff]
    %v41 = vld [vmem:[%s1 + $0xe0] sm:$0xff]
    %v42 = vld [vmem:[%s1 + $0xe8] sm:$0xff]
    %v43 = vld [vmem:[%s1 + $0xf0] sm:$0xff]
    %v44 = vld [vmem:[%s1 + $0xf8] sm:$0xff]
    %v47 = vunpack.c.l.s4 1983009808
    %v48 = vunpack.c.0.s8 %v47
    %v49 = vlaneseq
    %v50 = vshrl.u32 %v49, 7
    %v51 = vsub.s32 %v48, %v50
    %v52 = vrot.slane %v12, %v51
    %v53 = vcombine.high %v52, %v52
    %56 = vmatprep.subr.mxu0 0.0
    %v57 = vand.u32 %v28, 4294901760
    %58 = vmatpush1.msra.mxu0 %v57
    %59 = vmatprep.subr.mxu0 0.0
    %v60 = vand.u32 %v27, 4294901760
    %61 = vmatpush1.msra.mxu0 %v60
    %62 = vmatprep.subr.mxu0 0.0
    %v63 = vand.u32 %v26, 4294901760
    %64 = vmatpush1.msra.mxu0 %v63
    %65 = vmatprep.subr.mxu0 0.0
    %v66 = vand.u32 %v25, 4294901760
    %67 = vmatpush1.msra.mxu0 %v66
    %68 = vmatprep.subr.mxu0 0.0
    %v69 = vand.u32 %v24, 4294901760
    %70 = vmatpush1.msra.mxu0 %v69
    %71 = vmatprep.subr.mxu0 0.0
    %v72 = vand.u32 %v23, 4294901760
    %73 = vmatpush1.msra.mxu0 %v72
    %74 = vmatprep.subr.mxu0 0.0
    %v75 = vand.u32 %v22, 4294901760
    %76 = vmatpush1.msra.mxu0 %v75
    %77 = vmatprep.subr.mxu0 0.0
    %v78 = vand.u32 %v21, 4294901760
    %79 = vmatpush1.msra.mxu0 %v78
    %80 = vmatprep.subr.mxu0 0.0
    %v81 = vand.u32 %v20, 4294901760
    %82 = vmatpush1.msra.mxu0 %v81
    %83 = vmatprep.subr.mxu0 0.0
    %v84 = vand.u32 %v19, 4294901760
    %85 = vmatpush1.msra.mxu0 %v84
    %86 = vmatprep.subr.mxu0 0.0
    %v87 = vand.u32 %v18, 4294901760
    %88 = vmatpush1.msra.mxu0 %v87
    %89 = vmatprep.subr.mxu0 0.0
    %v90 = vand.u32 %v17, 4294901760
    %91 = vmatpush1.msra.mxu0 %v90
    %92 = vmatprep.subr.mxu0 0.0
    %v93 = vand.u32 %v16, 4294901760
    %94 = vmatpush1.msra.mxu0 %v93
    %95 = vmatprep.subr.mxu0 0.0
    %v96 = vand.u32 %v15, 4294901760
    %97 = vmatpush1.msra.mxu0 %v96
    %98 = vmatprep.subr.mxu0 0.0
    %v99 = vand.u32 %v14, 4294901760
    %100 = vmatpush1.msra.mxu0 %v99
    %101 = vmatprep.subr.mxu0 0.0
    %v102 = vand.u32 %v13, 4294901760
    %103 = vmatpush1.msra.mxu0 %v102
    %104 = vmatprep.subr.mxu0 0.0
    %v105 = vand.u32 %v44, 4294901760
    %106 = vmatpush2.msra.mxu0 %v105
    %107 = vmatprep.subr.mxu0 0.0
    %v108 = vand.u32 %v43, 4294901760
    %109 = vmatpush2.msra.mxu0 %v108
    %110 = vmatprep.subr.mxu0 0.0
    %v111 = vand.u32 %v42, 4294901760
    %112 = vmatpush2.msra.mxu0 %v111
    %113 = vmatprep.subr.mxu0 0.0
    %v114 = vand.u32 %v41, 4294901760
    %115 = vmatpush2.msra.mxu0 %v114
    %116 = vmatprep.subr.mxu0 0.0
    %v117 = vand.u32 %v40, 4294901760
    %118 = vmatpush2.msra.mxu0 %v117
    %119 = vmatprep.subr.mxu0 0.0
    %v120 = vand.u32 %v39, 4294901760
    %121 = vmatpush2.msra.mxu0 %v120
    %122 = vmatprep.subr.mxu0 0.0
    %v123 = vand.u32 %v38, 4294901760
    %124 = vmatpush2.msra.mxu0 %v123
    %125 = vmatprep.subr.mxu0 0.0
    %v126 = vand.u32 %v37, 4294901760
    %127 = vmatpush2.msra.mxu0 %v126
    %128 = vmatprep.subr.mxu0 0.0
    %v129 = vand.u32 %v36, 4294901760
    %130 = vmatpush2.msra.mxu0 %v129
    %131 = vmatprep.subr.mxu0 0.0
    %v132 = vand.u32 %v35, 4294901760
    %133 = vmatpush2.msra.mxu0 %v132
    %134 = vmatprep.subr.mxu0 0.0
    %v135 = vand.u32 %v34, 4294901760
    %136 = vmatpush2.msra.mxu0 %v135
    %137 = vmatprep.subr.mxu0 0.0
    %v138 = vand.u32 %v33, 4294901760
    %139 = vmatpush2.msra.mxu0 %v138
    %140 = vmatprep.subr.mxu0 0.0
    %v141 = vand.u32 %v32, 4294901760
    %142 = vmatpush2.msra.mxu0 %v141
    %143 = vmatprep.subr.mxu0 0.0
    %v144 = vand.u32 %v31, 4294901760
    %145 = vmatpush2.msra.mxu0 %v144
    %146 = vmatprep.subr.mxu0 0.0
    %v147 = vand.u32 %v30, 4294901760
    %148 = vmatpush2.msra.mxu0 %v147
    %149 = vmatprep.subr.mxu0 0.0
    %v150 = vand.u32 %v29, 4294901760
    %151 = vmatpush2.msra.mxu0 %v150
    %v152 = vand.u32 %v53, 4294901760
    %v153 = vsub.f32 %v53, %v152
    %v154 = vand.u32 %v153, 4294901760
    %v155 = vsub.f32 %v153, %v154
    %v156 = vand.u32 %v155, 4294901760
    %157 = vmatprep.mubr.f32.mxu0 %v156
    %v158 = vand.u32 %v52, 4294901760
    %v159 = vsub.f32 %v52, %v158
    %v160 = vand.u32 %v159, 4294901760
    %v161 = vsub.f32 %v159, %v160
    %v162 = vand.u32 %v161, 4294901760
    %163 = vmatmul.mubr.f32.gmra.mxu0 %v162
    %v164 = vpop.f32.mrf.mxu0
    %v165 = vadd.f32 0.0, %v164
    %v166 = vpop.f32.mrf.mxu0
    %167 = vdwg.mxu0
    %168 = vmatprep.subr.mxu0 0.0
    %v169 = vand.u32 %v28, 4294901760
    %v170 = vsub.f32 %v28, %v169
    %v171 = vand.u32 %v170, 4294901760
    %v172 = vsub.f32 %v170, %v171
    %v173 = vand.u32 %v172, 4294901760
    %174 = vmatpush1.msra.mxu0 %v173
    %175 = vmatprep.subr.mxu0 0.0
    %v176 = vand.u32 %v27, 4294901760
    %v177 = vsub.f32 %v27, %v176
    %v178 = vand.u32 %v177, 4294901760
    %v179 = vsub.f32 %v177, %v178
    %v180 = vand.u32 %v179, 4294901760
    %181 = vmatpush1.msra.mxu0 %v180
    %182 = vmatprep.subr.mxu0 0.0
    %v183 = vand.u32 %v26, 4294901760
    %v184 = vsub.f32 %v26, %v183
    %v185 = vand.u32 %v184, 4294901760
    %v186 = vsub.f32 %v184, %v185
    %v187 = vand.u32 %v186, 4294901760
    %188 = vmatpush1.msra.mxu0 %v187
    %189 = vmatprep.subr.mxu0 0.0
    %v190 = vand.u32 %v25, 4294901760
    %v191 = vsub.f32 %v25, %v190
    %v192 = vand.u32 %v191, 4294901760
    %v193 = vsub.f32 %v191, %v192
    %v194 = vand.u32 %v193, 4294901760
    %195 = vmatpush1.msra.mxu0 %v194
    %196 = vmatprep.subr.mxu0 0.0
    %v197 = vand.u32 %v24, 4294901760
    %v198 = vsub.f32 %v24, %v197
    %v199 = vand.u32 %v198, 4294901760
    %v200 = vsub.f32 %v198, %v199
    %v201 = vand.u32 %v200, 4294901760
    %202 = vmatpush1.msra.mxu0 %v201
    %203 = vmatprep.subr.mxu0 0.0
    %v204 = vand.u32 %v23, 4294901760
    %v205 = vsub.f32 %v23, %v204
    %v206 = vand.u32 %v205, 4294901760
    %v207 = vsub.f32 %v205, %v206
    %v208 = vand.u32 %v207, 4294901760
    %209 = vmatpush1.msra.mxu0 %v208
    %210 = vmatprep.subr.mxu0 0.0
    %v211 = vand.u32 %v22, 4294901760
    %v212 = vsub.f32 %v22, %v211
    %v213 = vand.u32 %v212, 4294901760
    %v214 = vsub.f32 %v212, %v213
    %v215 = vand.u32 %v214, 4294901760
    %216 = vmatpush1.msra.mxu0 %v215
    %217 = vmatprep.subr.mxu0 0.0
    %v218 = vand.u32 %v21, 4294901760
    %v219 = vsub.f32 %v21, %v218
    %v220 = vand.u32 %v219, 4294901760
    %v221 = vsub.f32 %v219, %v220
    %v222 = vand.u32 %v221, 4294901760
    %223 = vmatpush1.msra.mxu0 %v222
    %224 = vmatprep.subr.mxu0 0.0
    %v225 = vand.u32 %v20, 4294901760
    %v226 = vsub.f32 %v20, %v225
    %v227 = vand.u32 %v226, 4294901760
    %v228 = vsub.f32 %v226, %v227
    %v229 = vand.u32 %v228, 4294901760
    %230 = vmatpush1.msra.mxu0 %v229
    %231 = vmatprep.subr.mxu0 0.0
    %v232 = vand.u32 %v19, 4294901760
    %v233 = vsub.f32 %v19, %v232
    %v234 = vand.u32 %v233, 4294901760
    %v235 = vsub.f32 %v233, %v234
    %v236 = vand.u32 %v235, 4294901760
    %237 = vmatpush1.msra.mxu0 %v236
    %238 = vmatprep.subr.mxu0 0.0
    %v239 = vand.u32 %v18, 4294901760
    %v240 = vsub.f32 %v18, %v239
    %v241 = vand.u32 %v240, 4294901760
    %v242 = vsub.f32 %v240, %v241
    %v243 = vand.u32 %v242, 4294901760
    %244 = vmatpush1.msra.mxu0 %v243
    %245 = vmatprep.subr.mxu0 0.0
    %v246 = vand.u32 %v17, 4294901760
    %v247 = vsub.f32 %v17, %v246
    %v248 = vand.u32 %v247, 4294901760
    %v249 = vsub.f32 %v247, %v248
    %v250 = vand.u32 %v249, 4294901760
    %251 = vmatpush1.msra.mxu0 %v250
    %252 = vmatprep.subr.mxu0 0.0
    %v253 = vand.u32 %v16, 4294901760
    %v254 = vsub.f32 %v16, %v253
    %v255 = vand.u32 %v254, 4294901760
    %v256 = vsub.f32 %v254, %v255
    %v257 = vand.u32 %v256, 4294901760
    %258 = vmatpush1.msra.mxu0 %v257
    %259 = vmatprep.subr.mxu0 0.0
    %v260 = vand.u32 %v15, 4294901760
    %v261 = vsub.f32 %v15, %v260
    %v262 = vand.u32 %v261, 4294901760
    %v263 = vsub.f32 %v261, %v262
    %v264 = vand.u32 %v263, 4294901760
    %265 = vmatpush1.msra.mxu0 %v264
    %266 = vmatprep.subr.mxu0 0.0
    %v267 = vand.u32 %v14, 4294901760
    %v268 = vsub.f32 %v14, %v267
    %v269 = vand.u32 %v268, 4294901760
    %v270 = vsub.f32 %v268, %v269
    %v271 = vand.u32 %v270, 4294901760
    %272 = vmatpush1.msra.mxu0 %v271
    %273 = vmatprep.subr.mxu0 0.0
    %v274 = vand.u32 %v13, 4294901760
    %v275 = vsub.f32 %v13, %v274
    %v276 = vand.u32 %v275, 4294901760
    %v277 = vsub.f32 %v275, %v276
    %v278 = vand.u32 %v277, 4294901760
    %279 = vmatpush1.msra.mxu0 %v278
    %280 = vmatprep.subr.mxu0 0.0
    %v281 = vand.u32 %v44, 4294901760
    %v282 = vsub.f32 %v44, %v281
    %v283 = vand.u32 %v282, 4294901760
    %v284 = vsub.f32 %v282, %v283
    %v285 = vand.u32 %v284, 4294901760
    %286 = vmatpush2.msra.mxu0 %v285
    %287 = vmatprep.subr.mxu0 0.0
    %v288 = vand.u32 %v43, 4294901760
    %v289 = vsub.f32 %v43, %v288
    %v290 = vand.u32 %v289, 4294901760
    %v291 = vsub.f32 %v289, %v290
    %v292 = vand.u32 %v291, 4294901760
    %293 = vmatpush2.msra.mxu0 %v292
    %294 = vmatprep.subr.mxu0 0.0
    %v295 = vand.u32 %v42, 4294901760
    %v296 = vsub.f32 %v42, %v295
    %v297 = vand.u32 %v296, 4294901760
    %v298 = vsub.f32 %v296, %v297
    %v299 = vand.u32 %v298, 4294901760
    %300 = vmatpush2.msra.mxu0 %v299
    %301 = vmatprep.subr.mxu0 0.0
    %v302 = vand.u32 %v41, 4294901760
    %v303 = vsub.f32 %v41, %v302
    %v304 = vand.u32 %v303, 4294901760
    %v305 = vsub.f32 %v303, %v304
    %v306 = vand.u32 %v305, 4294901760
    %307 = vmatpush2.msra.mxu0 %v306
    %308 = vmatprep.subr.mxu0 0.0
    %v309 = vand.u32 %v40, 4294901760
    %v310 = vsub.f32 %v40, %v309
    %v311 = vand.u32 %v310, 4294901760
    %v312 = vsub.f32 %v310, %v311
    %v313 = vand.u32 %v312, 4294901760
    %314 = vmatpush2.msra.mxu0 %v313
    %315 = vmatprep.subr.mxu0 0.0
    %v316 = vand.u32 %v39, 4294901760
    %v317 = vsub.f32 %v39, %v316
    %v318 = vand.u32 %v317, 4294901760
    %v319 = vsub.f32 %v317, %v318
    %v320 = vand.u32 %v319, 4294901760
    %321 = vmatpush2.msra.mxu0 %v320
    %322 = vmatprep.subr.mxu0 0.0
    %v323 = vand.u32 %v38, 4294901760
    %v324 = vsub.f32 %v38, %v323
    %v325 = vand.u32 %v324, 4294901760
    %v326 = vsub.f32 %v324, %v325
    %v327 = vand.u32 %v326, 4294901760
    %328 = vmatpush2.msra.mxu0 %v327
    %329 = vmatprep.subr.mxu0 0.0
    %v330 = vand.u32 %v37, 4294901760
    %v331 = vsub.f32 %v37, %v330
    %v332 = vand.u32 %v331, 4294901760
    %v333 = vsub.f32 %v331, %v332
    %v334 = vand.u32 %v333, 4294901760
    %335 = vmatpush2.msra.mxu0 %v334
    %336 = vmatprep.subr.mxu0 0.0
    %v337 = vand.u32 %v36, 4294901760
    %v338 = vsub.f32 %v36, %v337
    %v339 = vand.u32 %v338, 4294901760
    %v340 = vsub.f32 %v338, %v339
    %v341 = vand.u32 %v340, 4294901760
    %342 = vmatpush2.msra.mxu0 %v341
    %343 = vmatprep.subr.mxu0 0.0
    %v344 = vand.u32 %v35, 4294901760
    %v345 = vsub.f32 %v35, %v344
    %v346 = vand.u32 %v345, 4294901760
    %v347 = vsub.f32 %v345, %v346
    %v348 = vand.u32 %v347, 4294901760
    %349 = vmatpush2.msra.mxu0 %v348
    %350 = vmatprep.subr.mxu0 0.0
    %v351 = vand.u32 %v34, 4294901760
    %v352 = vsub.f32 %v34, %v351
    %v353 = vand.u32 %v352, 4294901760
    %v354 = vsub.f32 %v352, %v353
    %v355 = vand.u32 %v354, 4294901760
    %356 = vmatpush2.msra.mxu0 %v355
    %357 = vmatprep.subr.mxu0 0.0
    %v358 = vand.u32 %v33, 4294901760
    %v359 = vsub.f32 %v33, %v358
    %v360 = vand.u32 %v359, 4294901760
    %v361 = vsub.f32 %v359, %v360
    %v362 = vand.u32 %v361, 4294901760
    %363 = vmatpush2.msra.mxu0 %v362
    %364 = vmatprep.subr.mxu0 0.0
    %v365 = vand.u32 %v32, 4294901760
    %v366 = vsub.f32 %v32, %v365
    %v367 = vand.u32 %v366, 4294901760
    %v368 = vsub.f32 %v366, %v367
    %v369 = vand.u32 %v368, 4294901760
    %370 = vmatpush2.msra.mxu0 %v369
    %371 = vmatprep.subr.mxu0 0.0
    %v372 = vand.u32 %v31, 4294901760
    %v373 = vsub.f32 %v31, %v372
    %v374 = vand.u32 %v373, 4294901760
    %v375 = vsub.f32 %v373, %v374
    %v376 = vand.u32 %v375, 4294901760
    %377 = vmatpush2.msra.mxu0 %v376
    %378 = vmatprep.subr.mxu0 0.0
    %v379 = vand.u32 %v30, 4294901760
    %v380 = vsub.f32 %v30, %v379
    %v381 = vand.u32 %v380, 4294901760
    %v382 = vsub.f32 %v380, %v381
    %v383 = vand.u32 %v382, 4294901760
    %384 = vmatpush2.msra.mxu0 %v383
    %385 = vmatprep.subr.mxu0 0.0
    %v386 = vand.u32 %v29, 4294901760
    %v387 = vsub.f32 %v29, %v386
    %v388 = vand.u32 %v387, 4294901760
    %v389 = vsub.f32 %v387, %v388
    %v390 = vand.u32 %v389, 4294901760
    %391 = vmatpush2.msra.mxu0 %v390
    %v392 = vand.u32 %v53, 4294901760
    %393 = vmatprep.mubr.f32.mxu0 %v392
    %v394 = vand.u32 %v52, 4294901760
    %395 = vmatmul.mubr.f32.gmra.mxu0 %v394
    %v396 = vpop.f32.mrf.mxu0
    %v397 = vadd.f32 %v165, %v396
    %v398 = vpop.f32.mrf.mxu0
    %399 = vdwg.mxu0
    %400 = vmatprep.subr.mxu0 0.0
    %v401 = vand.u32 %v28, 4294901760
    %v402 = vsub.f32 %v28, %v401
    %403 = vmatpush1.msra.mxu0 %v402
    %404 = vmatprep.subr.mxu0 0.0
    %v405 = vand.u32 %v27, 4294901760
    %v406 = vsub.f32 %v27, %v405
    %407 = vmatpush1.msra.mxu0 %v406
    %408 = vmatprep.subr.mxu0 0.0
    %v409 = vand.u32 %v26, 4294901760
    %v410 = vsub.f32 %v26, %v409
    %411 = vmatpush1.msra.mxu0 %v410
    %412 = vmatprep.subr.mxu0 0.0
    %v413 = vand.u32 %v25, 4294901760
    %v414 = vsub.f32 %v25, %v413
    %415 = vmatpush1.msra.mxu0 %v414
    %416 = vmatprep.subr.mxu0 0.0
    %v417 = vand.u32 %v24, 4294901760
    %v418 = vsub.f32 %v24, %v417
    %419 = vmatpush1.msra.mxu0 %v418
    %420 = vmatprep.subr.mxu0 0.0
    %v421 = vand.u32 %v23, 4294901760
    %v422 = vsub.f32 %v23, %v421
    %423 = vmatpush1.msra.mxu0 %v422
    %424 = vmatprep.subr.mxu0 0.0
    %v425 = vand.u32 %v22, 4294901760
    %v426 = vsub.f32 %v22, %v425
    %427 = vmatpush1.msra.mxu0 %v426
    %428 = vmatprep.subr.mxu0 0.0
    %v429 = vand.u32 %v21, 4294901760
    %v430 = vsub.f32 %v21, %v429
    %431 = vmatpush1.msra.mxu0 %v430
    %432 = vmatprep.subr.mxu0 0.0
    %v433 = vand.u32 %v20, 4294901760
    %v434 = vsub.f32 %v20, %v433
    %435 = vmatpush1.msra.mxu0 %v434
    %436 = vmatprep.subr.mxu0 0.0
    %v437 = vand.u32 %v19, 4294901760
    %v438 = vsub.f32 %v19, %v437
    %439 = vmatpush1.msra.mxu0 %v438
    %440 = vmatprep.subr.mxu0 0.0
    %v441 = vand.u32 %v18, 4294901760
    %v442 = vsub.f32 %v18, %v441
    %443 = vmatpush1.msra.mxu0 %v442
    %444 = vmatprep.subr.mxu0 0.0
    %v445 = vand.u32 %v17, 4294901760
    %v446 = vsub.f32 %v17, %v445
    %447 = vmatpush1.msra.mxu0 %v446
    %448 = vmatprep.subr.mxu0 0.0
    %v449 = vand.u32 %v16, 4294901760
    %v450 = vsub.f32 %v16, %v449
    %451 = vmatpush1.msra.mxu0 %v450
    %452 = vmatprep.subr.mxu0 0.0
    %v453 = vand.u32 %v15, 4294901760
    %v454 = vsub.f32 %v15, %v453
    %455 = vmatpush1.msra.mxu0 %v454
    %456 = vmatprep.subr.mxu0 0.0
    %v457 = vand.u32 %v14, 4294901760
    %v458 = vsub.f32 %v14, %v457
    %459 = vmatpush1.msra.mxu0 %v458
    %460 = vmatprep.subr.mxu0 0.0
    %v461 = vand.u32 %v13, 4294901760
    %v462 = vsub.f32 %v13, %v461
    %463 = vmatpush1.msra.mxu0 %v462
    %464 = vmatprep.subr.mxu0 0.0
    %v465 = vand.u32 %v44, 4294901760
    %v466 = vsub.f32 %v44, %v465
    %467 = vmatpush2.msra.mxu0 %v466
    %468 = vmatprep.subr.mxu0 0.0
    %v469 = vand.u32 %v43, 4294901760
    %v470 = vsub.f32 %v43, %v469
    %471 = vmatpush2.msra.mxu0 %v470
    %472 = vmatprep.subr.mxu0 0.0
    %v473 = vand.u32 %v42, 4294901760
    %v474 = vsub.f32 %v42, %v473
    %475 = vmatpush2.msra.mxu0 %v474
    %476 = vmatprep.subr.mxu0 0.0
    %v477 = vand.u32 %v41, 4294901760
    %v478 = vsub.f32 %v41, %v477
    %479 = vmatpush2.msra.mxu0 %v478
    %480 = vmatprep.subr.mxu0 0.0
    %v481 = vand.u32 %v40, 4294901760
    %v482 = vsub.f32 %v40, %v481
    %483 = vmatpush2.msra.mxu0 %v482
    %484 = vmatprep.subr.mxu0 0.0
    %v485 = vand.u32 %v39, 4294901760
    %v486 = vsub.f32 %v39, %v485
    %487 = vmatpush2.msra.mxu0 %v486
    %488 = vmatprep.subr.mxu0 0.0
    %v489 = vand.u32 %v38, 4294901760
    %v490 = vsub.f32 %v38, %v489
    %491 = vmatpush2.msra.mxu0 %v490
    %492 = vmatprep.subr.mxu0 0.0
    %v493 = vand.u32 %v37, 4294901760
    %v494 = vsub.f32 %v37, %v493
    %495 = vmatpush2.msra.mxu0 %v494
    %496 = vmatprep.subr.mxu0 0.0
    %v497 = vand.u32 %v36, 4294901760
    %v498 = vsub.f32 %v36, %v497
    %499 = vmatpush2.msra.mxu0 %v498
    %500 = vmatprep.subr.mxu0 0.0
    %v501 = vand.u32 %v35, 4294901760
    %v502 = vsub.f32 %v35, %v501
    %503 = vmatpush2.msra.mxu0 %v502
    %504 = vmatprep.subr.mxu0 0.0
    %v505 = vand.u32 %v34, 4294901760
    %v506 = vsub.f32 %v34, %v505
    %507 = vmatpush2.msra.mxu0 %v506
    %508 = vmatprep.subr.mxu0 0.0
    %v509 = vand.u32 %v33, 4294901760
    %v510 = vsub.f32 %v33, %v509
    %511 = vmatpush2.msra.mxu0 %v510
    %512 = vmatprep.subr.mxu0 0.0
    %v513 = vand.u32 %v32, 4294901760
    %v514 = vsub.f32 %v32, %v513
    %515 = vmatpush2.msra.mxu0 %v514
    %516 = vmatprep.subr.mxu0 0.0
    %v517 = vand.u32 %v31, 4294901760
    %v518 = vsub.f32 %v31, %v517
    %519 = vmatpush2.msra.mxu0 %v518
    %520 = vmatprep.subr.mxu0 0.0
    %v521 = vand.u32 %v30, 4294901760
    %v522 = vsub.f32 %v30, %v521
    %523 = vmatpush2.msra.mxu0 %v522
    %524 = vmatprep.subr.mxu0 0.0
    %v525 = vand.u32 %v29, 4294901760
    %v526 = vsub.f32 %v29, %v525
    %527 = vmatpush2.msra.mxu0 %v526
    %v528 = vand.u32 %v53, 4294901760
    %v529 = vsub.f32 %v53, %v528
    %530 = vmatprep.mubr.f32.mxu0 %v529
    %v531 = vand.u32 %v52, 4294901760
    %v532 = vsub.f32 %v52, %v531
    %533 = vmatmul.mubr.f32.gmra.mxu0 %v532
    %v534 = vpop.f32.mrf.mxu0
    %v535 = vadd.f32 %v397, %v534
    %v536 = vpop.f32.mrf.mxu0
    %537 = vdwg.mxu0
    %538 = vmatprep.subr.mxu0 0.0
    %v539 = vand.u32 %v28, 4294901760
    %540 = vmatpush1.msra.mxu0 %v539
    %541 = vmatprep.subr.mxu0 0.0
    %v542 = vand.u32 %v27, 4294901760
    %543 = vmatpush1.msra.mxu0 %v542
    %544 = vmatprep.subr.mxu0 0.0
    %v545 = vand.u32 %v26, 4294901760
    %546 = vmatpush1.msra.mxu0 %v545
    %547 = vmatprep.subr.mxu0 0.0
    %v548 = vand.u32 %v25, 4294901760
    %549 = vmatpush1.msra.mxu0 %v548
    %550 = vmatprep.subr.mxu0 0.0
    %v551 = vand.u32 %v24, 4294901760
    %552 = vmatpush1.msra.mxu0 %v551
    %553 = vmatprep.subr.mxu0 0.0
    %v554 = vand.u32 %v23, 4294901760
    %555 = vmatpush1.msra.mxu0 %v554
    %556 = vmatprep.subr.mxu0 0.0
    %v557 = vand.u32 %v22, 4294901760
    %558 = vmatpush1.msra.mxu0 %v557
    %559 = vmatprep.subr.mxu0 0.0
    %v560 = vand.u32 %v21, 4294901760
    %561 = vmatpush1.msra.mxu0 %v560
    %562 = vmatprep.subr.mxu0 0.0
    %v563 = vand.u32 %v20, 4294901760
    %564 = vmatpush1.msra.mxu0 %v563
    %565 = vmatprep.subr.mxu0 0.0
    %v566 = vand.u32 %v19, 4294901760
    %567 = vmatpush1.msra.mxu0 %v566
    %568 = vmatprep.subr.mxu0 0.0
    %v569 = vand.u32 %v18, 4294901760
    %570 = vmatpush1.msra.mxu0 %v569
    %571 = vmatprep.subr.mxu0 0.0
    %v572 = vand.u32 %v17, 4294901760
    %573 = vmatpush1.msra.mxu0 %v572
    %574 = vmatprep.subr.mxu0 0.0
    %v575 = vand.u32 %v16, 4294901760
    %576 = vmatpush1.msra.mxu0 %v575
    %577 = vmatprep.subr.mxu0 0.0
    %v578 = vand.u32 %v15, 4294901760
    %579 = vmatpush1.msra.mxu0 %v578
    %580 = vmatprep.subr.mxu0 0.0
    %v581 = vand.u32 %v14, 4294901760
    %582 = vmatpush1.msra.mxu0 %v581
    %583 = vmatprep.subr.mxu0 0.0
    %v584 = vand.u32 %v13, 4294901760
    %585 = vmatpush1.msra.mxu0 %v584
    %586 = vmatprep.subr.mxu0 0.0
    %v587 = vand.u32 %v44, 4294901760
    %588 = vmatpush2.msra.mxu0 %v587
    %589 = vmatprep.subr.mxu0 0.0
    %v590 = vand.u32 %v43, 4294901760
    %591 = vmatpush2.msra.mxu0 %v590
    %592 = vmatprep.subr.mxu0 0.0
    %v593 = vand.u32 %v42, 4294901760
    %594 = vmatpush2.msra.mxu0 %v593
    %595 = vmatprep.subr.mxu0 0.0
    %v596 = vand.u32 %v41, 4294901760
    %597 = vmatpush2.msra.mxu0 %v596
    %598 = vmatprep.subr.mxu0 0.0
    %v599 = vand.u32 %v40, 4294901760
    %600 = vmatpush2.msra.mxu0 %v599
    %601 = vmatprep.subr.mxu0 0.0
    %v602 = vand.u32 %v39, 4294901760
    %603 = vmatpush2.msra.mxu0 %v602
    %604 = vmatprep.subr.mxu0 0.0
    %v605 = vand.u32 %v38, 4294901760
    %606 = vmatpush2.msra.mxu0 %v605
    %607 = vmatprep.subr.mxu0 0.0
    %v608 = vand.u32 %v37, 4294901760
    %609 = vmatpush2.msra.mxu0 %v608
    %610 = vmatprep.subr.mxu0 0.0
    %v611 = vand.u32 %v36, 4294901760
    %612 = vmatpush2.msra.mxu0 %v611
    %613 = vmatprep.subr.mxu0 0.0
    %v614 = vand.u32 %v35, 4294901760
    %615 = vmatpush2.msra.mxu0 %v614
    %616 = vmatprep.subr.mxu0 0.0
    %v617 = vand.u32 %v34, 4294901760
    %618 = vmatpush2.msra.mxu0 %v617
    %619 = vmatprep.subr.mxu0 0.0
    %v620 = vand.u32 %v33, 4294901760
    %621 = vmatpush2.msra.mxu0 %v620
    %622 = vmatprep.subr.mxu0 0.0
    %v623 = vand.u32 %v32, 4294901760
    %624 = vmatpush2.msra.mxu0 %v623
    %625 = vmatprep.subr.mxu0 0.0
    %v626 = vand.u32 %v31, 4294901760
    %627 = vmatpush2.msra.mxu0 %v626
    %628 = vmatprep.subr.mxu0 0.0
    %v629 = vand.u32 %v30, 4294901760
    %630 = vmatpush2.msra.mxu0 %v629
    %631 = vmatprep.subr.mxu0 0.0
    %v632 = vand.u32 %v29, 4294901760
    %633 = vmatpush2.msra.mxu0 %v632
    %v634 = vand.u32 %v53, 4294901760
    %v635 = vsub.f32 %v53, %v634
    %v636 = vand.u32 %v635, 4294901760
    %637 = vmatprep.mubr.f32.mxu0 %v636
    %v638 = vand.u32 %v52, 4294901760
    %v639 = vsub.f32 %v52, %v638
    %v640 = vand.u32 %v639, 4294901760
    %641 = vmatmul.mubr.f32.gmra.mxu0 %v640
    %v642 = vpop.f32.mrf.mxu0
    %v643 = vadd.f32 %v535, %v642
    %v644 = vpop.f32.mrf.mxu0
    %645 = vdwg.mxu0
    %646 = vmatprep.subr.mxu0 0.0
    %v647 = vand.u32 %v28, 4294901760
    %v648 = vsub.f32 %v28, %v647
    %v649 = vand.u32 %v648, 4294901760
    %650 = vmatpush1.msra.mxu0 %v649
    %651 = vmatprep.subr.mxu0 0.0
    %v652 = vand.u32 %v27, 4294901760
    %v653 = vsub.f32 %v27, %v652
    %v654 = vand.u32 %v653, 4294901760
    %655 = vmatpush1.msra.mxu0 %v654
    %656 = vmatprep.subr.mxu0 0.0
    %v657 = vand.u32 %v26, 4294901760
    %v658 = vsub.f32 %v26, %v657
    %v659 = vand.u32 %v658, 4294901760
    %660 = vmatpush1.msra.mxu0 %v659
    %661 = vmatprep.subr.mxu0 0.0
    %v662 = vand.u32 %v25, 4294901760
    %v663 = vsub.f32 %v25, %v662
    %v664 = vand.u32 %v663, 4294901760
    %665 = vmatpush1.msra.mxu0 %v664
    %666 = vmatprep.subr.mxu0 0.0
    %v667 = vand.u32 %v24, 4294901760
    %v668 = vsub.f32 %v24, %v667
    %v669 = vand.u32 %v668, 4294901760
    %670 = vmatpush1.msra.mxu0 %v669
    %671 = vmatprep.subr.mxu0 0.0
    %v672 = vand.u32 %v23, 4294901760
    %v673 = vsub.f32 %v23, %v672
    %v674 = vand.u32 %v673, 4294901760
    %675 = vmatpush1.msra.mxu0 %v674
    %676 = vmatprep.subr.mxu0 0.0
    %v677 = vand.u32 %v22, 4294901760
    %v678 = vsub.f32 %v22, %v677
    %v679 = vand.u32 %v678, 4294901760
    %680 = vmatpush1.msra.mxu0 %v679
    %681 = vmatprep.subr.mxu0 0.0
    %v682 = vand.u32 %v21, 4294901760
    %v683 = vsub.f32 %v21, %v682
    %v684 = vand.u32 %v683, 4294901760
    %685 = vmatpush1.msra.mxu0 %v684
    %686 = vmatprep.subr.mxu0 0.0
    %v687 = vand.u32 %v20, 4294901760
    %v688 = vsub.f32 %v20, %v687
    %v689 = vand.u32 %v688, 4294901760
    %690 = vmatpush1.msra.mxu0 %v689
    %691 = vmatprep.subr.mxu0 0.0
    %v692 = vand.u32 %v19, 4294901760
    %v693 = vsub.f32 %v19, %v692
    %v694 = vand.u32 %v693, 4294901760
    %695 = vmatpush1.msra.mxu0 %v694
    %696 = vmatprep.subr.mxu0 0.0
    %v697 = vand.u32 %v18, 4294901760
    %v698 = vsub.f32 %v18, %v697
    %v699 = vand.u32 %v698, 4294901760
    %700 = vmatpush1.msra.mxu0 %v699
    %701 = vmatprep.subr.mxu0 0.0
    %v702 = vand.u32 %v17, 4294901760
    %v703 = vsub.f32 %v17, %v702
    %v704 = vand.u32 %v703, 4294901760
    %705 = vmatpush1.msra.mxu0 %v704
    %706 = vmatprep.subr.mxu0 0.0
    %v707 = vand.u32 %v16, 4294901760
    %v708 = vsub.f32 %v16, %v707
    %v709 = vand.u32 %v708, 4294901760
    %710 = vmatpush1.msra.mxu0 %v709
    %711 = vmatprep.subr.mxu0 0.0
    %v712 = vand.u32 %v15, 4294901760
    %v713 = vsub.f32 %v15, %v712
    %v714 = vand.u32 %v713, 4294901760
    %715 = vmatpush1.msra.mxu0 %v714
    %716 = vmatprep.subr.mxu0 0.0
    %v717 = vand.u32 %v14, 4294901760
    %v718 = vsub.f32 %v14, %v717
    %v719 = vand.u32 %v718, 4294901760
    %720 = vmatpush1.msra.mxu0 %v719
    %721 = vmatprep.subr.mxu0 0.0
    %v722 = vand.u32 %v13, 4294901760
    %v723 = vsub.f32 %v13, %v722
    %v724 = vand.u32 %v723, 4294901760
    %725 = vmatpush1.msra.mxu0 %v724
    %726 = vmatprep.subr.mxu0 0.0
    %v727 = vand.u32 %v44, 4294901760
    %v728 = vsub.f32 %v44, %v727
    %v729 = vand.u32 %v728, 4294901760
    %730 = vmatpush2.msra.mxu0 %v729
    %731 = vmatprep.subr.mxu0 0.0
    %v732 = vand.u32 %v43, 4294901760
    %v733 = vsub.f32 %v43, %v732
    %v734 = vand.u32 %v733, 4294901760
    %735 = vmatpush2.msra.mxu0 %v734
    %736 = vmatprep.subr.mxu0 0.0
    %v737 = vand.u32 %v42, 4294901760
    %v738 = vsub.f32 %v42, %v737
    %v739 = vand.u32 %v738, 4294901760
    %740 = vmatpush2.msra.mxu0 %v739
    %741 = vmatprep.subr.mxu0 0.0
    %v742 = vand.u32 %v41, 4294901760
    %v743 = vsub.f32 %v41, %v742
    %v744 = vand.u32 %v743, 4294901760
    %745 = vmatpush2.msra.mxu0 %v744
    %746 = vmatprep.subr.mxu0 0.0
    %v747 = vand.u32 %v40, 4294901760
    %v748 = vsub.f32 %v40, %v747
    %v749 = vand.u32 %v748, 4294901760
    %750 = vmatpush2.msra.mxu0 %v749
    %751 = vmatprep.subr.mxu0 0.0
    %v752 = vand.u32 %v39, 4294901760
    %v753 = vsub.f32 %v39, %v752
    %v754 = vand.u32 %v753, 4294901760
    %755 = vmatpush2.msra.mxu0 %v754
    %756 = vmatprep.subr.mxu0 0.0
    %v757 = vand.u32 %v38, 4294901760
    %v758 = vsub.f32 %v38, %v757
    %v759 = vand.u32 %v758, 4294901760
    %760 = vmatpush2.msra.mxu0 %v759
    %761 = vmatprep.subr.mxu0 0.0
    %v762 = vand.u32 %v37, 4294901760
    %v763 = vsub.f32 %v37, %v762
    %v764 = vand.u32 %v763, 4294901760
    %765 = vmatpush2.msra.mxu0 %v764
    %766 = vmatprep.subr.mxu0 0.0
    %v767 = vand.u32 %v36, 4294901760
    %v768 = vsub.f32 %v36, %v767
    %v769 = vand.u32 %v768, 4294901760
    %770 = vmatpush2.msra.mxu0 %v769
    %771 = vmatprep.subr.mxu0 0.0
    %v772 = vand.u32 %v35, 4294901760
    %v773 = vsub.f32 %v35, %v772
    %v774 = vand.u32 %v773, 4294901760
    %775 = vmatpush2.msra.mxu0 %v774
    %776 = vmatprep.subr.mxu0 0.0
    %v777 = vand.u32 %v34, 4294901760
    %v778 = vsub.f32 %v34, %v777
    %v779 = vand.u32 %v778, 4294901760
    %780 = vmatpush2.msra.mxu0 %v779
    %781 = vmatprep.subr.mxu0 0.0
    %v782 = vand.u32 %v33, 4294901760
    %v783 = vsub.f32 %v33, %v782
    %v784 = vand.u32 %v783, 4294901760
    %785 = vmatpush2.msra.mxu0 %v784
    %786 = vmatprep.subr.mxu0 0.0
    %v787 = vand.u32 %v32, 4294901760
    %v788 = vsub.f32 %v32, %v787
    %v789 = vand.u32 %v788, 4294901760
    %790 = vmatpush2.msra.mxu0 %v789
    %791 = vmatprep.subr.mxu0 0.0
    %v792 = vand.u32 %v31, 4294901760
    %v793 = vsub.f32 %v31, %v792
    %v794 = vand.u32 %v793, 4294901760
    %795 = vmatpush2.msra.mxu0 %v794
    %796 = vmatprep.subr.mxu0 0.0
    %v797 = vand.u32 %v30, 4294901760
    %v798 = vsub.f32 %v30, %v797
    %v799 = vand.u32 %v798, 4294901760
    %800 = vmatpush2.msra.mxu0 %v799
    %801 = vmatprep.subr.mxu0 0.0
    %v802 = vand.u32 %v29, 4294901760
    %v803 = vsub.f32 %v29, %v802
    %v804 = vand.u32 %v803, 4294901760
    %805 = vmatpush2.msra.mxu0 %v804
    %v806 = vand.u32 %v53, 4294901760
    %807 = vmatprep.mubr.f32.mxu0 %v806
    %v808 = vand.u32 %v52, 4294901760
    %809 = vmatmul.mubr.f32.gmra.mxu0 %v808
    %v810 = vpop.f32.mrf.mxu0
    %v811 = vadd.f32 %v643, %v810
    %v812 = vpop.f32.mrf.mxu0
    %813 = vdwg.mxu0
    %814 = vmatprep.subr.mxu0 0.0
    %v815 = vand.u32 %v28, 4294901760
    %816 = vmatpush1.msra.mxu0 %v815
    %817 = vmatprep.subr.mxu0 0.0
    %v818 = vand.u32 %v27, 4294901760
    %819 = vmatpush1.msra.mxu0 %v818
    %820 = vmatprep.subr.mxu0 0.0
    %v821 = vand.u32 %v26, 4294901760
    %822 = vmatpush1.msra.mxu0 %v821
    %823 = vmatprep.subr.mxu0 0.0
    %v824 = vand.u32 %v25, 4294901760
    %825 = vmatpush1.msra.mxu0 %v824
    %826 = vmatprep.subr.mxu0 0.0
    %v827 = vand.u32 %v24, 4294901760
    %828 = vmatpush1.msra.mxu0 %v827
    %829 = vmatprep.subr.mxu0 0.0
    %v830 = vand.u32 %v23, 4294901760
    %831 = vmatpush1.msra.mxu0 %v830
    %832 = vmatprep.subr.mxu0 0.0
    %v833 = vand.u32 %v22, 4294901760
    %834 = vmatpush1.msra.mxu0 %v833
    %835 = vmatprep.subr.mxu0 0.0
    %v836 = vand.u32 %v21, 4294901760
    %837 = vmatpush1.msra.mxu0 %v836
    %838 = vmatprep.subr.mxu0 0.0
    %v839 = vand.u32 %v20, 4294901760
    %840 = vmatpush1.msra.mxu0 %v839
    %841 = vmatprep.subr.mxu0 0.0
    %v842 = vand.u32 %v19, 4294901760
    %843 = vmatpush1.msra.mxu0 %v842
    %844 = vmatprep.subr.mxu0 0.0
    %v845 = vand.u32 %v18, 4294901760
    %846 = vmatpush1.msra.mxu0 %v845
    %847 = vmatprep.subr.mxu0 0.0
    %v848 = vand.u32 %v17, 4294901760
    %849 = vmatpush1.msra.mxu0 %v848
    %850 = vmatprep.subr.mxu0 0.0
    %v851 = vand.u32 %v16, 4294901760
    %852 = vmatpush1.msra.mxu0 %v851
    %853 = vmatprep.subr.mxu0 0.0
    %v854 = vand.u32 %v15, 4294901760
    %855 = vmatpush1.msra.mxu0 %v854
    %856 = vmatprep.subr.mxu0 0.0
    %v857 = vand.u32 %v14, 4294901760
    %858 = vmatpush1.msra.mxu0 %v857
    %859 = vmatprep.subr.mxu0 0.0
    %v860 = vand.u32 %v13, 4294901760
    %861 = vmatpush1.msra.mxu0 %v860
    %862 = vmatprep.subr.mxu0 0.0
    %v863 = vand.u32 %v44, 4294901760
    %864 = vmatpush2.msra.mxu0 %v863
    %865 = vmatprep.subr.mxu0 0.0
    %v866 = vand.u32 %v43, 4294901760
    %867 = vmatpush2.msra.mxu0 %v866
    %868 = vmatprep.subr.mxu0 0.0
    %v869 = vand.u32 %v42, 4294901760
    %870 = vmatpush2.msra.mxu0 %v869
    %871 = vmatprep.subr.mxu0 0.0
    %v872 = vand.u32 %v41, 4294901760
    %873 = vmatpush2.msra.mxu0 %v872
    %874 = vmatprep.subr.mxu0 0.0
    %v875 = vand.u32 %v40, 4294901760
    %876 = vmatpush2.msra.mxu0 %v875
    %877 = vmatprep.subr.mxu0 0.0
    %v878 = vand.u32 %v39, 4294901760
    %879 = vmatpush2.msra.mxu0 %v878
    %880 = vmatprep.subr.mxu0 0.0
    %v881 = vand.u32 %v38, 4294901760
    %882 = vmatpush2.msra.mxu0 %v881
    %883 = vmatprep.subr.mxu0 0.0
    %v884 = vand.u32 %v37, 4294901760
    %885 = vmatpush2.msra.mxu0 %v884
    %886 = vmatprep.subr.mxu0 0.0
    %v887 = vand.u32 %v36, 4294901760
    %888 = vmatpush2.msra.mxu0 %v887
    %889 = vmatprep.subr.mxu0 0.0
    %v890 = vand.u32 %v35, 4294901760
    %891 = vmatpush2.msra.mxu0 %v890
    %892 = vmatprep.subr.mxu0 0.0
    %v893 = vand.u32 %v34, 4294901760
    %894 = vmatpush2.msra.mxu0 %v893
    %895 = vmatprep.subr.mxu0 0.0
    %v896 = vand.u32 %v33, 4294901760
    %897 = vmatpush2.msra.mxu0 %v896
    %898 = vmatprep.subr.mxu0 0.0
    %v899 = vand.u32 %v32, 4294901760
    %900 = vmatpush2.msra.mxu0 %v899
    %901 = vmatprep.subr.mxu0 0.0
    %v902 = vand.u32 %v31, 4294901760
    %903 = vmatpush2.msra.mxu0 %v902
    %904 = vmatprep.subr.mxu0 0.0
    %v905 = vand.u32 %v30, 4294901760
    %906 = vmatpush2.msra.mxu0 %v905
    %907 = vmatprep.subr.mxu0 0.0
    %v908 = vand.u32 %v29, 4294901760
    %909 = vmatpush2.msra.mxu0 %v908
    %v910 = vand.u32 %v53, 4294901760
    %911 = vmatprep.mubr.f32.mxu0 %v910
    %v912 = vand.u32 %v52, 4294901760
    %913 = vmatmul.mubr.f32.gmra.mxu0 %v912
    %v914 = vpop.f32.mrf.mxu0
    %v915 = vadd.f32 %v811, %v914
    %v916 = vpop.f32.mrf.mxu0
    %917 = vdwg.mxu0
    %vm918 = vcmask 123904
    %919 = vst.msk [vmem:[#allocation2] sm:$0x3] %vm918, %v915
    // Predicated region
    $region10: #{simple_serial_selection.1} parent=1 // pred_check
      _
    $region11: #{simple_serial_selection.1} parent=1 // pred_check_branch
      %921 = sbr.rel (0) target = $region13
    $region12: #{simple_serial_selection.1} parent=1 // pred_region
      %s923 = ssub.s32 32, 32
      %924 = vsyncadd [#allocation3], %s923
      %s926 = sshll.u32 [#allocation2], 4
      %s927 = int_to_ptr.vmem [resolvable:$true] %s926
      %929 = dma.vmem_to_hbm [thread:$0]  %s927, 32, %s2, [#allocation3]
    $region13: #{simple_serial_selection.1} parent=1 // pred_fallthru
      _
    // Predicated region
    $region14: #{simple_serial_selection.1} parent=1 // pred_check
      _
    $region15: #{simple_serial_selection.1} parent=1 // pred_check_branch
      %931 = sbr.rel (0) target = $region17
    $region16: #{simple_serial_selection.1} parent=1 // pred_region
      %932 = dma.done [#allocation3], 32
    $region17: #{simple_serial_selection.1} parent=1 // pred_fallthru
      _
    %933 = vsyncpa [#allocation3], 1

</llo_original>
